<compile_context>
chip_gen: v7x
topology: tpu7x:2x2x1
jax: 0.10.0
libtpu: 0.0.40
codegen_flags: <defaults>
</compile_context>

<pallas_src>
import functools
import math

import jax
import jax.numpy as jnp
from jax import lax
from jax.experimental import pallas as pl
from jax.experimental.pallas import tpu as pltpu

_VMEM = pl.BlockSpec(memory_space=pltpu.MemorySpace.VMEM)


# -----------------------------------------------------------------------------
# Shared MLP body: two Linear + SiLU layers, all f32, f32 MXU accumulation.
# params_ref layout: (2, K+1, P) with K = max(E, P);
#   params[0, :E, :]  = W1 (E, P),   params[0, E, :]  = b1
#   params[1, :P, :]  = W2 (P, P),   params[1, P, :]  = b2
# -----------------------------------------------------------------------------
def _mlp(x, params_ref, E, P):
    w1 = params_ref[0, :E, :]            # (E, P)   static slice -> free
    b1 = params_ref[0, E:E + 1, :]       # (1, P)
    w2 = params_ref[1, :P, :]            # (P, P)
    b2 = params_ref[1, P:P + 1, :]       # (1, P)
    h = jnp.dot(x, w1, preferred_element_type=jnp.float32) + b1
    h = h * jax.nn.sigmoid(h)            # SiLU (f32 VPU/EUP)
    y = jnp.dot(h, w2, preferred_element_type=jnp.float32) + b2
    return y * jax.nn.sigmoid(y)


# -----------------------------------------------------------------------------
# Kernel 1: MLP over the WHOLE table in one shot (Path A, precompute).
# -----------------------------------------------------------------------------
def _table_mlp_kernel(table_ref, params_ref, o_ref, *, E, P):
    o_ref[...] = _mlp(table_ref[...], params_ref, E, P)


def precompute_diffusion_embedding(table, params):
    """Run the MLP once over the full (T, E) table. Returns (T, P) f32."""
    T, E = table.shape
    P = params.shape[-1]
    return pl.pallas_call(
        functools.partial(_table_mlp_kernel, E=E, P=P),
        out_shape=jax.ShapeDtypeStruct((T, P), jnp.float32),
        in_specs=[_VMEM, _VMEM],
        out_specs=_VMEM,
    )(table, params)


# -----------------------------------------------------------------------------
# Kernel 2: fused one-hot gather + MLP for a batch of integer diffusion steps.
# -----------------------------------------------------------------------------
def _fused_gather_mlp_kernel(steps_ref, table_ref, params_ref, o_ref, *, T, E, P):
    B = o_ref.shape[0]
    steps = jnp.clip(steps_ref[...], 0, T - 1)                       # (B, 1) i32
    iota = lax.broadcasted_iota(jnp.int32, (B, T), 1)                 # (B, T)
    onehot = (steps == iota).astype(jnp.float32)                      # (B, T)
    x = jnp.dot(onehot, table_ref[...],
                preferred_element_type=jnp.float32)                   # (B, E) gather
    o_ref[...] = _mlp(x, params_ref, E, P)


def diffusion_embedding_forward_fused(diffusion_step, table, params):
    """diffusion_step: (B,) int -> (B, P) f32, gather fused into the kernel."""
    # TODO(synk): DiffWave-style float-step lerp between table rows is not
    # implemented; only integer step indices (matches the given module).
    B = diffusion_step.shape[0]
    T, E = table.shape
    P = params.shape[-1]
    steps = diffusion_step.astype(jnp.int32).reshape(B, 1)
    return pl.pallas_call(
        functools.partial(_fused_gather_mlp_kernel, T=T, E=E, P=P),
        out_shape=jax.ShapeDtypeStruct((B, P), jnp.float32),
        in_specs=[_VMEM, _VMEM, _VMEM],
        out_specs=_VMEM,
    )(steps, table, params)


def diffusion_embedding_forward_precomputed(precomputed, diffusion_step):
    """Sampling-loop fast path: per-step forward is just a row lookup."""
    # TODO(synk): in a real sampling loop this lookup should be fused into the
    # downstream consumer kernel via scalar prefetch (PrefetchScalarGridSpec)
    # to delete one dispatch per step; there is no consumer in this script.
    return precomputed[diffusion_step]


# -----------------------------------------------------------------------------
# Module glue: embedding-table construction, parameter init, parameter packing.
# -----------------------------------------------------------------------------
def build_embedding(num_steps, half_dim):
    # Mirrors DiffusionEmbedding._build_embedding(num_steps, embedding_dim / 2).
    steps = jnp.arange(num_steps, dtype=jnp.float32)[:, None]            # (T, 1)
    freqs = 10.0 ** (jnp.arange(half_dim, dtype=jnp.float32)
                     / (half_dim - 1) * 4.0)[None, :]                    # (1, d)
    table = steps * freqs                                                # (T, d)
    return jnp.concatenate([jnp.sin(table), jnp.cos(table)], axis=1)     # (T, 2d)


def init_params(key, embedding_dim, projection_dim):
    # nn.Linear-shaped params, stored transposed as (in, out); biases (1, out).
    k1, k2, k3, k4 = jax.random.split(key, 4)
    bound1 = 1.0 / math.sqrt(embedding_dim)
    bound2 = 1.0 / math.sqrt(projection_dim)
    w1 = jax.random.uniform(k1, (embedding_dim, projection_dim),
                            jnp.float32, -bound1, bound1)
    b1 = jax.random.uniform(k2, (1, projection_dim), jnp.float32, -bound1, bound1)
    w2 = jax.random.uniform(k3, (projection_dim, projection_dim),
                            jnp.float32, -bound2, bound2)
    b2 = jax.random.uniform(k4, (1, projection_dim), jnp.float32, -bound2, bound2)
    return w1, b1, w2, b2


def pack_params(w1, b1, w2, b2):
    """Pack both Linear layers into one (2, K+1, P) f32 array (done ONCE)."""
    E, P = w1.shape
    K = max(E, P)
    p1 = jnp.concatenate([w1, b1.reshape(1, P)], axis=0)   # (E+1, P)
    p2 = jnp.concatenate([w2, b2.reshape(1, P)], axis=0)   # (P+1, P)
    p1 = jnp.pad(p1, ((0, K + 1 - p1.shape[0]), (0, 0)))
    p2 = jnp.pad(p2, ((0, K + 1 - p2.shape[0]), (0, 0)))
    return jnp.stack([p1, p2], axis=0).astype(jnp.float32)  # (2, K+1, P)


# -----------------------------------------------------------------------------
if __name__ == "__main__":
    num_steps = 50
    embedding_dim = 128
    projection_dim = 128
    batch = 8

    key = jax.random.PRNGKey(0)
    k_step, k_params = jax.random.split(key)

    embedding = build_embedding(num_steps, embedding_dim // 2)   # (50, 128) f32
    w1, b1, w2, b2 = init_params(k_params, embedding_dim, projection_dim)
    params = pack_params(w1, b1, w2, b2)                         # (2, 129, 128)

    diffusion_step = jax.random.randint(k_step, (batch,), 0, num_steps)

    # Path A (preferred in a sampling loop): one kernel call over the whole
    # table, then per-step forward is a cheap lookup.
    precomputed = precompute_diffusion_embedding(embedding, params)
    out_pre = diffusion_embedding_forward_precomputed(precomputed, diffusion_step)
    out_pre = jax.block_until_ready(out_pre)

    # Path B: fully fused gather + MLP kernel taking diffusion_step directly.
    out_fused = diffusion_embedding_forward_fused(diffusion_step, embedding, params)
    out_fused = jax.block_until_ready(out_fused)

    # ---------------- correctness checks (all-f32 reference) ----------------
    def ref_f32(step):
        x = embedding[step]
        h = x @ w1 + b1
        h = h * jax.nn.sigmoid(h)
        y = h @ w2 + b2
        return y * jax.nn.sigmoid(y)

    r = ref_f32(diffusion_step)

    assert out_fused.shape == (batch, projection_dim)
    assert out_pre.shape == (batch, projection_dim)
    assert jnp.allclose(out_fused, r, atol=1e-3, rtol=1e-3)
    assert jnp.allclose(out_pre, r, atol=1e-3, rtol=1e-3)
    assert jnp.allclose(out_fused, out_pre, atol=1e-4, rtol=1e-4)

    print("KERNEL_OK")
</pallas_src>

<mosaic_0001>
module attributes {stable_mosaic.version = 11 : i64} {
  func.func @_table_mlp_kernel(%arg0: memref<50x128xf32, #tpu.memory_space<vmem>>, %arg1: memref<2x129x128xf32, #tpu.memory_space<vmem>>, %arg2: memref<50x128xf32, #tpu.memory_space<vmem>>) attributes {dimension_semantics = [], scalar_prefetch = 0 : i64, scratch_operands = 0 : i64, tpu.core_type = #tpu.core_type<tc>} {
    %c0 = arith.constant 0 : index
    %c0_0 = arith.constant 0 : index
    %0 = vector.load %arg0[%c0, %c0_0] : memref<50x128xf32, #tpu.memory_space<vmem>>, vector<50x128xf32>
    %c0_1 = arith.constant 0 : index
    %c0_2 = arith.constant 0 : index
    %c0_3 = arith.constant 0 : index
    %1 = vector.load %arg1[%c0_1, %c0_2, %c0_3] : memref<2x129x128xf32, #tpu.memory_space<vmem>>, vector<1x128x128xf32>
    %2 = vector.shape_cast %1 : vector<1x128x128xf32> to vector<128x128xf32>
    %c0_4 = arith.constant 0 : index
    %c128 = arith.constant 128 : index
    %c0_5 = arith.constant 0 : index
    %3 = vector.load %arg1[%c0_4, %c128, %c0_5] : memref<2x129x128xf32, #tpu.memory_space<vmem>>, vector<1x1x128xf32>
    %4 = vector.shape_cast %3 : vector<1x1x128xf32> to vector<1x128xf32>
    %c1 = arith.constant 1 : index
    %c0_6 = arith.constant 0 : index
    %c0_7 = arith.constant 0 : index
    %5 = vector.load %arg1[%c1, %c0_6, %c0_7] : memref<2x129x128xf32, #tpu.memory_space<vmem>>, vector<1x128x128xf32>
    %6 = vector.shape_cast %5 : vector<1x128x128xf32> to vector<128x128xf32>
    %c1_8 = arith.constant 1 : index
    %c128_9 = arith.constant 128 : index
    %c0_10 = arith.constant 0 : index
    %7 = vector.load %arg1[%c1_8, %c128_9, %c0_10] : memref<2x129x128xf32, #tpu.memory_space<vmem>>, vector<1x1x128xf32>
    %8 = vector.shape_cast %7 : vector<1x1x128xf32> to vector<1x128xf32>
    %cst = arith.constant dense<0.000000e+00> : vector<50x128xf32>
    %9 = tpu.matmul %0, %2, %cst {dimension_numbers = #tpu.dot_dimension_numbers<[1], [0], [0], [1], [0, 0, 1, 1], [], []>} : vector<50x128xf32>, vector<128x128xf32>, vector<50x128xf32> -> vector<50x128xf32>
    %10 = vector.broadcast %4 : vector<1x128xf32> to vector<50x128xf32>
    %11 = arith.addf %9, %10 : vector<50x128xf32>
    %12 = arith.negf %11 : vector<50x128xf32>
    %13 = math.exp %12 : vector<50x128xf32>
    %cst_11 = arith.constant 1.000000e+00 : f32
    %14 = vector.broadcast %cst_11 : f32 to vector<50x128xf32>
    %15 = arith.addf %14, %13 : vector<50x128xf32>
    %16 = arith.divf %14, %15 : vector<50x128xf32>
    %17 = arith.mulf %11, %16 : vector<50x128xf32>
    %cst_12 = arith.constant dense<0.000000e+00> : vector<50x128xf32>
    %18 = tpu.matmul %17, %6, %cst_12 {dimension_numbers = #tpu.dot_dimension_numbers<[1], [0], [0], [1], [0, 0, 1, 1], [], []>} : vector<50x128xf32>, vector<128x128xf32>, vector<50x128xf32> -> vector<50x128xf32>
    %19 = vector.broadcast %8 : vector<1x128xf32> to vector<50x128xf32>
    %20 = arith.addf %18, %19 : vector<50x128xf32>
    %21 = arith.negf %20 : vector<50x128xf32>
    %22 = math.exp %21 : vector<50x128xf32>
    %cst_13 = arith.constant 1.000000e+00 : f32
    %23 = vector.broadcast %cst_13 : f32 to vector<50x128xf32>
    %24 = arith.addf %23, %22 : vector<50x128xf32>
    %25 = arith.divf %23, %24 : vector<50x128xf32>
    %26 = arith.mulf %20, %25 : vector<50x128xf32>
    %c0_14 = arith.constant 0 : index
    %c0_15 = arith.constant 0 : index
    %27 = vector.load %arg2[%c0_14, %c0_15] : memref<50x128xf32, #tpu.memory_space<vmem>>, vector<50x128xf32>
    tpu.vector_store %arg2[%c0_14, %c0_15], %26 {strides = array<i32>} : memref<50x128xf32, #tpu.memory_space<vmem>>, vector<50x128xf32>,
    return
  }
}

</mosaic_0001>

<llo_original>
// kernel: tpu_custom_call.1
$region0: #{tpu_custom_call.1}
  #allocation0 [shape = 'u32[]', space=smem, size = 0x4, offset = 0x4, fixed_abs, tag = 'smem constant byte address 0x4 - core index']
  #allocation1 [shape = 'u32[144,128]{1,0:T(1,128)}', space=vmem, size = 0x12000, scoped, tag = 'internal scratch']
  %s0 = inlined_call_operand.vmem [shape: f32[50,128], index: 0, kind: input, shape index: {}]
  %s1 = inlined_call_operand.vmem [shape: f32[2,129,128], index: 1, kind: input, shape index: {}]
  %s2 = inlined_call_operand.hbm [shape: f32[50,128], index: 2, kind: output, shape index: {}]
  %s3 = sld [smem:[#allocation0]]
  $region18: #{tpu_custom_call.1} parent=0
    _
  %s5 = ssub.s32 1, %s3
  %s6 = scalar_select 0, %s5, %s3
  $region1: #{tpu_custom_call.1} parent=0
    #allocation2 [shape = 'u8[28672]{0}', space=vmem, size = 0x7000, scoped, tag = 'output window, operand 0, single buffered']
    #allocation3 [shape = 's32[1]{0}', space=sflag, size = 0x4, scoped, tag = 'scoped memory for tpu_custom_call.1']
    %7 = vsyncpa [#allocation3], 0
    // Predicated region
    $region2: #{tpu_custom_call.1} parent=1 // pred_check
      _
    $region3: #{tpu_custom_call.1} parent=1 // pred_check_branch
      %9 = sbr.rel (0) target = $region5
    $region4: #{tpu_custom_call.1} parent=1 // pred_region
      _
    $region5: #{tpu_custom_call.1} parent=1 // pred_fallthru
      _
    // Predicated region
    $region6: #{tpu_custom_call.1} parent=1 // pred_check
      _
    $region7: #{tpu_custom_call.1} parent=1 // pred_check_branch
      %11 = sbr.rel (0) target = $region9
    $region8: #{tpu_custom_call.1} parent=1 // pred_region
      _
    $region9: #{tpu_custom_call.1} parent=1 // pred_fallthru
      _
    %v12 = vld [vmem:[%s0] sm:$0xff]
    %v13 = vld [vmem:[%s0 + $0x8] sm:$0xff]
    %v14 = vld [vmem:[%s0 + $0x10] sm:$0xff]
    %v15 = vld [vmem:[%s0 + $0x18] sm:$0xff]
    %v16 = vld [vmem:[%s0 + $0x20] sm:$0xff]
    %v17 = vld [vmem:[%s0 + $0x28] sm:$0xff]
    %v18 = vld [vmem:[%s0 + $0x30] sm:$0x3]
    %v19 = vld [vmem:[%s1] sm:$0xff]
    %v20 = vld [vmem:[%s1 + $0x8] sm:$0xff]
    %v21 = vld [vmem:[%s1 + $0x10] sm:$0xff]
    %v22 = vld [vmem:[%s1 + $0x18] sm:$0xff]
    %v23 = vld [vmem:[%s1 + $0x20] sm:$0xff]
    %v24 = vld [vmem:[%s1 + $0x28] sm:$0xff]
    %v25 = vld [vmem:[%s1 + $0x30] sm:$0xff]
    %v26 = vld [vmem:[%s1 + $0x38] sm:$0xff]
    %v27 = vld [vmem:[%s1 + $0x40] sm:$0xff]
    %v28 = vld [vmem:[%s1 + $0x48] sm:$0xff]
    %v29 = vld [vmem:[%s1 + $0x50] sm:$0xff]
    %v30 = vld [vmem:[%s1 + $0x58] sm:$0xff]
    %v31 = vld [vmem:[%s1 + $0x60] sm:$0xff]
    %v32 = vld [vmem:[%s1 + $0x68] sm:$0xff]
    %v33 = vld [vmem:[%s1 + $0x70] sm:$0xff]
    %v34 = vld [vmem:[%s1 + $0x78] sm:$0xff]
    %v35 = vld [vmem:[%s1 + $0x80] sm:$0x1]
    %s36 = scalar_lea.vmem %s1, 136
    %v37 = vld [vmem:[%s36] sm:$0xff]
    %v38 = vld [vmem:[%s36 + $0x8] sm:$0xff]
    %v39 = vld [vmem:[%s36 + $0x10] sm:$0xff]
    %v40 = vld [vmem:[%s36 + $0x18] sm:$0xff]
    %v41 = vld [vmem:[%s36 + $0x20] sm:$0xff]
    %v42 = vld [vmem:[%s36 + $0x28] sm:$0xff]
    %v43 = vld [vmem:[%s36 + $0x30] sm:$0xff]
    %v44 = vld [vmem:[%s36 + $0x38] sm:$0xff]
    %v45 = vld [vmem:[%s36 + $0x40] sm:$0xff]
    %v46 = vld [vmem:[%s36 + $0x48] sm:$0xff]
    %v47 = vld [vmem:[%s36 + $0x50] sm:$0xff]
    %v48 = vld [vmem:[%s36 + $0x58] sm:$0xff]
    %v49 = vld [vmem:[%s36 + $0x60] sm:$0xff]
    %v50 = vld [vmem:[%s36 + $0x68] sm:$0xff]
    %v51 = vld [vmem:[%s36 + $0x70] sm:$0xff]
    %v52 = vld [vmem:[%s36 + $0x78] sm:$0xff]
    %v53 = vld [vmem:[%s36 + $0x80] sm:$0x1]
    %v54 = vlaneseq
    %v55 = vshrl.u32 %v54, 7
    %v56 = vsub.s32 0, %v55
    %v57 = vrot.slane %v35, %v56
    %58 = vmatprep.subr.mxu0 0.0
    %59 = vmatpush1.msra.mxu0 %v19
    %60 = vmatprep.subr.mxu0 0.0
    %61 = vmatpush1.msra.mxu0 %v20
    %62 = vmatprep.subr.mxu0 0.0
    %63 = vmatpush1.msra.mxu0 %v21
    %64 = vmatprep.subr.mxu0 0.0
    %65 = vmatpush1.msra.mxu0 %v22
    %66 = vmatprep.subr.mxu0 0.0
    %67 = vmatpush1.msra.mxu0 %v23
    %68 = vmatprep.subr.mxu0 0.0
    %69 = vmatpush1.msra.mxu0 %v24
    %70 = vmatprep.subr.mxu0 0.0
    %71 = vmatpush1.msra.mxu0 %v25
    %72 = vmatprep.subr.mxu0 0.0
    %73 = vmatpush1.msra.mxu0 %v26
    %74 = vmatprep.subr.mxu0 0.0
    %75 = vmatpush1.msra.mxu0 %v27
    %76 = vmatprep.subr.mxu0 0.0
    %77 = vmatpush1.msra.mxu0 %v28
    %78 = vmatprep.subr.mxu0 0.0
    %79 = vmatpush1.msra.mxu0 %v29
    %80 = vmatprep.subr.mxu0 0.0
    %81 = vmatpush1.msra.mxu0 %v30
    %82 = vmatprep.subr.mxu0 0.0
    %83 = vmatpush1.msra.mxu0 %v31
    %84 = vmatprep.subr.mxu0 0.0
    %85 = vmatpush1.msra.mxu0 %v32
    %86 = vmatprep.subr.mxu0 0.0
    %87 = vmatpush1.msra.mxu0 %v33
    %88 = vmatprep.subr.mxu0 0.0
    %89 = vmatpush1.msra.mxu0 %v34
    %90 = vmatprep.subr.mxu0 0.0
    %91 = vmatpush1.msra.mxu0 0.0
    %92 = vmatprep.subr.mxu0 0.0
    %93 = vmatpush1.msra.mxu0 0.0
    %94 = vmatprep.subr.mxu0 0.0
    %95 = vmatpush1.msra.mxu0 0.0
    %96 = vmatprep.subr.mxu0 0.0
    %97 = vmatpush1.msra.mxu0 0.0
    %98 = vmatprep.subr.mxu0 0.0
    %99 = vmatpush1.msra.mxu0 0.0
    %100 = vmatprep.subr.mxu0 0.0
    %101 = vmatpush1.msra.mxu0 0.0
    %102 = vmatprep.subr.mxu0 0.0
    %103 = vmatpush1.msra.mxu0 0.0
    %104 = vmatprep.subr.mxu0 0.0
    %105 = vmatpush1.msra.mxu0 0.0
    %106 = vmatprep.subr.mxu0 0.0
    %107 = vmatpush1.msra.mxu0 0.0
    %108 = vmatprep.subr.mxu0 0.0
    %109 = vmatpush1.msra.mxu0 0.0
    %110 = vmatprep.subr.mxu0 0.0
    %111 = vmatpush1.msra.mxu0 0.0
    %112 = vmatprep.subr.mxu0 0.0
    %113 = vmatpush1.msra.mxu0 0.0
    %114 = vmatprep.subr.mxu0 0.0
    %115 = vmatpush1.msra.mxu0 0.0
    %116 = vmatprep.subr.mxu0 0.0
    %117 = vmatpush1.msra.mxu0 0.0
    %118 = vmatprep.subr.mxu0 0.0
    %119 = vmatpush1.msra.mxu0 0.0
    %120 = vmatprep.subr.mxu0 0.0
    %121 = vmatpush1.msra.mxu0 0.0
    %122 = vmatprep.mubr.f32.mxu0 0.0
    %123 = vmatmul.mubr.f32.gmra.mrb[0].mxu0 %v12
    %v124 = vpop.f32.mrb[0].mxu0
    %v125 = vadd.f32 %v57, %v124
    %v126 = vpop.f32.mrb[0].mxu0
    %127 = vmatprep.mubr.f32.mxu0 0.0
    %128 = vmatmul.mubr.f32.gmra.mrb[0].mxu0 %v13
    %v129 = vpop.f32.mrb[0].mxu0
    %v130 = vadd.f32 %v57, %v129
    %v131 = vpop.f32.mrb[0].mxu0
    %132 = vmatprep.mubr.f32.mxu0 0.0
    %133 = vmatmul.mubr.f32.gmra.mrb[0].mxu0 %v14
    %v134 = vpop.f32.mrb[0].mxu0
    %v135 = vadd.f32 %v57, %v134
    %v136 = vpop.f32.mrb[0].mxu0
    %137 = vmatprep.mubr.f32.mxu0 0.0
    %138 = vmatmul.mubr.f32.gmra.mrb[0].mxu0 %v15
    %v139 = vpop.f32.mrb[0].mxu0
    %v140 = vadd.f32 %v57, %v139
    %v141 = vpop.f32.mrb[0].mxu0
    %142 = vmatprep.mubr.f32.mxu0 0.0
    %143 = vmatmul.mubr.f32.gmra.mrb[0].mxu0 %v16
    %v144 = vpop.f32.mrb[0].mxu0
    %v145 = vadd.f32 %v57, %v144
    %v146 = vpop.f32.mrb[0].mxu0
    %147 = vmatprep.mubr.f32.mxu0 0.0
    %148 = vmatmul.mubr.f32.gmra.mrb[0].mxu0 %v17
    %v149 = vpop.f32.mrb[0].mxu0
    %v150 = vadd.f32 %v57, %v149
    %v151 = vpop.f32.mrb[0].mxu0
    %152 = vmatprep.mubr.f32.mxu0 0.0
    %153 = vmatmul.mubr.f32.gmra.mrb[0].mxu0 %v18
    %v154 = vpop.f32.mrb[0].mxu0
    %v155 = vadd.f32 %v57, %v154
    %v156 = vpop.f32.mrb[0].mxu0
    %157 = vdwg.mxu0
    %v158 = vxor.u32 %v125, 2147483648
    %v159 = vxor.u32 %v130, 2147483648
    %v160 = vxor.u32 %v135, 2147483648
    %v161 = vxor.u32 %v140, 2147483648
    %v162 = vxor.u32 %v145, 2147483648
    %v163 = vxor.u32 %v150, 2147483648
    %v164 = vxor.u32 %v155, 2147483648
    %v165 = vmul.f32 %v158, 1.442695
    %v166 = vpow.pop %v165
    %v167 = vmul.f32 %v159, 1.442695
    %v168 = vpow.pop %v167
    %v169 = vmul.f32 %v160, 1.442695
    %v170 = vpow.pop %v169
    %v171 = vmul.f32 %v161, 1.442695
    %v172 = vpow.pop %v171
    %v173 = vmul.f32 %v162, 1.442695
    %v174 = vpow.pop %v173
    %v175 = vmul.f32 %v163, 1.442695
    %v176 = vpow.pop %v175
    %v177 = vmul.f32 %v164, 1.442695
    %v178 = vpow.pop %v177
    %v179 = vadd.f32 %v166, 1.0
    %v180 = vadd.f32 %v168, 1.0
    %v181 = vadd.f32 %v170, 1.0
    %v182 = vadd.f32 %v172, 1.0
    %v183 = vadd.f32 %v174, 1.0
    %v184 = vadd.f32 %v176, 1.0
    %v185 = vadd.f32 %v178, 1.0
    %v186 = vrcp.pop %v179
    %v187 = vmul.f32 1.0, %v186
    %v188 = vrcp.pop %v180
    %v189 = vmul.f32 1.0, %v188
    %v190 = vrcp.pop %v181
    %v191 = vmul.f32 1.0, %v190
    %v192 = vrcp.pop %v182
    %v193 = vmul.f32 1.0, %v192
    %v194 = vrcp.pop %v183
    %v195 = vmul.f32 1.0, %v194
    %v196 = vrcp.pop %v184
    %v197 = vmul.f32 1.0, %v196
    %v198 = vrcp.pop %v185
    %v199 = vmul.f32 1.0, %v198
    %v200 = vmul.f32 %v125, %v187
    %v201 = vmul.f32 %v130, %v189
    %v202 = vmul.f32 %v135, %v191
    %v203 = vmul.f32 %v140, %v193
    %v204 = vmul.f32 %v145, %v195
    %v205 = vmul.f32 %v150, %v197
    %v206 = vmul.f32 %v155, %v199
    %v207 = vlaneseq
    %v208 = vshrl.u32 %v207, 7
    %v209 = vsub.s32 0, %v208
    %v210 = vrot.slane %v53, %v209
    %211 = vmatprep.subr.mxu0 0.0
    %212 = vmatpush1.msra.mxu0 %v37
    %213 = vmatprep.subr.mxu0 0.0
    %214 = vmatpush1.msra.mxu0 %v38
    %215 = vmatprep.subr.mxu0 0.0
    %216 = vmatpush1.msra.mxu0 %v39
    %217 = vmatprep.subr.mxu0 0.0
    %218 = vmatpush1.msra.mxu0 %v40
    %219 = vmatprep.subr.mxu0 0.0
    %220 = vmatpush1.msra.mxu0 %v41
    %221 = vmatprep.subr.mxu0 0.0
    %222 = vmatpush1.msra.mxu0 %v42
    %223 = vmatprep.subr.mxu0 0.0
    %224 = vmatpush1.msra.mxu0 %v43
    %225 = vmatprep.subr.mxu0 0.0
    %226 = vmatpush1.msra.mxu0 %v44
    %227 = vmatprep.subr.mxu0 0.0
    %228 = vmatpush1.msra.mxu0 %v45
    %229 = vmatprep.subr.mxu0 0.0
    %230 = vmatpush1.msra.mxu0 %v46
    %231 = vmatprep.subr.mxu0 0.0
    %232 = vmatpush1.msra.mxu0 %v47
    %233 = vmatprep.subr.mxu0 0.0
    %234 = vmatpush1.msra.mxu0 %v48
    %235 = vmatprep.subr.mxu0 0.0
    %236 = vmatpush1.msra.mxu0 %v49
    %237 = vmatprep.subr.mxu0 0.0
    %238 = vmatpush1.msra.mxu0 %v50
    %239 = vmatprep.subr.mxu0 0.0
    %240 = vmatpush1.msra.mxu0 %v51
    %241 = vmatprep.subr.mxu0 0.0
    %242 = vmatpush1.msra.mxu0 %v52
    %243 = vmatprep.subr.mxu0 0.0
    %244 = vmatpush1.msra.mxu0 0.0
    %245 = vmatprep.subr.mxu0 0.0
    %246 = vmatpush1.msra.mxu0 0.0
    %247 = vmatprep.subr.mxu0 0.0
    %248 = vmatpush1.msra.mxu0 0.0
    %249 = vmatprep.subr.mxu0 0.0
    %250 = vmatpush1.msra.mxu0 0.0
    %251 = vmatprep.subr.mxu0 0.0
    %252 = vmatpush1.msra.mxu0 0.0
    %253 = vmatprep.subr.mxu0 0.0
    %254 = vmatpush1.msra.mxu0 0.0
    %255 = vmatprep.subr.mxu0 0.0
    %256 = vmatpush1.msra.mxu0 0.0
    %257 = vmatprep.subr.mxu0 0.0
    %258 = vmatpush1.msra.mxu0 0.0
    %259 = vmatprep.subr.mxu0 0.0
    %260 = vmatpush1.msra.mxu0 0.0
    %261 = vmatprep.subr.mxu0 0.0
    %262 = vmatpush1.msra.mxu0 0.0
    %263 = vmatprep.subr.mxu0 0.0
    %264 = vmatpush1.msra.mxu0 0.0
    %265 = vmatprep.subr.mxu0 0.0
    %266 = vmatpush1.msra.mxu0 0.0
    %267 = vmatprep.subr.mxu0 0.0
    %268 = vmatpush1.msra.mxu0 0.0
    %269 = vmatprep.subr.mxu0 0.0
    %270 = vmatpush1.msra.mxu0 0.0
    %271 = vmatprep.subr.mxu0 0.0
    %272 = vmatpush1.msra.mxu0 0.0
    %273 = vmatprep.subr.mxu0 0.0
    %274 = vmatpush1.msra.mxu0 0.0
    %275 = vmatprep.mubr.f32.mxu0 0.0
    %276 = vmatmul.mubr.f32.gmra.mrb[0].mxu0 %v200
    %v277 = vpop.f32.mrb[0].mxu0
    %v278 = vadd.f32 %v210, %v277
    %v279 = vpop.f32.mrb[0].mxu0
    %280 = vmatprep.mubr.f32.mxu0 0.0
    %281 = vmatmul.mubr.f32.gmra.mrb[0].mxu0 %v201
    %v282 = vpop.f32.mrb[0].mxu0
    %v283 = vadd.f32 %v210, %v282
    %v284 = vpop.f32.mrb[0].mxu0
    %285 = vmatprep.mubr.f32.mxu0 0.0
    %286 = vmatmul.mubr.f32.gmra.mrb[0].mxu0 %v202
    %v287 = vpop.f32.mrb[0].mxu0
    %v288 = vadd.f32 %v210, %v287
    %v289 = vpop.f32.mrb[0].mxu0
    %290 = vmatprep.mubr.f32.mxu0 0.0
    %291 = vmatmul.mubr.f32.gmra.mrb[0].mxu0 %v203
    %v292 = vpop.f32.mrb[0].mxu0
    %v293 = vadd.f32 %v210, %v292
    %v294 = vpop.f32.mrb[0].mxu0
    %295 = vmatprep.mubr.f32.mxu0 0.0
    %296 = vmatmul.mubr.f32.gmra.mrb[0].mxu0 %v204
    %v297 = vpop.f32.mrb[0].mxu0
    %v298 = vadd.f32 %v210, %v297
    %v299 = vpop.f32.mrb[0].mxu0
    %300 = vmatprep.mubr.f32.mxu0 0.0
    %301 = vmatmul.mubr.f32.gmra.mrb[0].mxu0 %v205
    %v302 = vpop.f32.mrb[0].mxu0
    %v303 = vadd.f32 %v210, %v302
    %v304 = vpop.f32.mrb[0].mxu0
    %305 = vmatprep.mubr.f32.mxu0 0.0
    %306 = vmatmul.mubr.f32.gmra.mrb[0].mxu0 %v206
    %v307 = vpop.f32.mrb[0].mxu0
    %v308 = vadd.f32 %v210, %v307
    %v309 = vpop.f32.mrb[0].mxu0
    %310 = vdwg.mxu0
    %v311 = vxor.u32 %v278, 2147483648
    %v312 = vxor.u32 %v283, 2147483648
    %v313 = vxor.u32 %v288, 2147483648
    %v314 = vxor.u32 %v293, 2147483648
    %v315 = vxor.u32 %v298, 2147483648
    %v316 = vxor.u32 %v303, 2147483648
    %v317 = vxor.u32 %v308, 2147483648
    %v318 = vmul.f32 %v311, 1.442695
    %v319 = vpow.pop %v318
    %v320 = vmul.f32 %v312, 1.442695
    %v321 = vpow.pop %v320
    %v322 = vmul.f32 %v313, 1.442695
    %v323 = vpow.pop %v322
    %v324 = vmul.f32 %v314, 1.442695
    %v325 = vpow.pop %v324
    %v326 = vmul.f32 %v315, 1.442695
    %v327 = vpow.pop %v326
    %v328 = vmul.f32 %v316, 1.442695
    %v329 = vpow.pop %v328
    %v330 = vmul.f32 %v317, 1.442695
    %v331 = vpow.pop %v330
    %v332 = vadd.f32 %v319, 1.0
    %v333 = vadd.f32 %v321, 1.0
    %v334 = vadd.f32 %v323, 1.0
    %v335 = vadd.f32 %v325, 1.0
    %v336 = vadd.f32 %v327, 1.0
    %v337 = vadd.f32 %v329, 1.0
    %v338 = vadd.f32 %v331, 1.0
    %v339 = vrcp.pop %v332
    %v340 = vmul.f32 1.0, %v339
    %v341 = vrcp.pop %v333
    %v342 = vmul.f32 1.0, %v341
    %v343 = vrcp.pop %v334
    %v344 = vmul.f32 1.0, %v343
    %v345 = vrcp.pop %v335
    %v346 = vmul.f32 1.0, %v345
    %v347 = vrcp.pop %v336
    %v348 = vmul.f32 1.0, %v347
    %v349 = vrcp.pop %v337
    %v350 = vmul.f32 1.0, %v349
    %v351 = vrcp.pop %v338
    %v352 = vmul.f32 1.0, %v351
    %v353 = vmul.f32 %v278, %v340
    %v354 = vmul.f32 %v283, %v342
    %v355 = vmul.f32 %v288, %v344
    %v356 = vmul.f32 %v293, %v346
    %v357 = vmul.f32 %v298, %v348
    %v358 = vmul.f32 %v303, %v350
    %v359 = vmul.f32 %v308, %v352
    %360 = vst [vmem:[#allocation2] sm:$0xff] %v353
    %361 = vst [vmem:[#allocation2 + $0x8] sm:$0xff] %v354
    %362 = vst [vmem:[#allocation2 + $0x10] sm:$0xff] %v355
    %363 = vst [vmem:[#allocation2 + $0x18] sm:$0xff] %v356
    %364 = vst [vmem:[#allocation2 + $0x20] sm:$0xff] %v357
    %365 = vst [vmem:[#allocation2 + $0x28] sm:$0xff] %v358
    %366 = vst [vmem:[#allocation2 + $0x30] sm:$0x3] %v359
    // Predicated region
    $region10: #{tpu_custom_call.1} parent=1 // pred_check
      _
    $region11: #{tpu_custom_call.1} parent=1 // pred_check_branch
      %368 = sbr.rel (0) target = $region13
    $region12: #{tpu_custom_call.1} parent=1 // pred_region
      %s370 = ssub.s32 896, 896
      %371 = vsyncadd [#allocation3], %s370
      %s372 = sshll.u32 [#allocation2], 4
      %s373 = int_to_ptr.vmem [resolvable:$true] %s372
      %378 = dma.vmem_to_hbm [thread:$0]  %s373, 896, %s2, [#allocation3], 128, 128, 8
    $region13: #{tpu_custom_call.1} parent=1 // pred_fallthru
      _
    // Predicated region
    $region14: #{tpu_custom_call.1} parent=1 // pred_check
      _
    $region15: #{tpu_custom_call.1} parent=1 // pred_check_branch
      %380 = sbr.rel (0) target = $region17
    $region16: #{tpu_custom_call.1} parent=1 // pred_region
      %381 = dma.done [#allocation3], 896
    $region17: #{tpu_custom_call.1} parent=1 // pred_fallthru
      _
    %382 = vsyncpa [#allocation3], 1

</llo_original>
